<compile_context>
chip_gen: v7x
topology: tpu7x:2x2x1
jax: 0.10.0
libtpu: 0.0.40
codegen_flags: <defaults>
</compile_context>

<pallas_src>
import jax
import jax.numpy as jnp
from jax.experimental import pallas as pl
from jax.experimental.pallas import tpu as pltpu


# Lanes per grid step.  32768 keeps the double-buffered block footprint ~4 MiB
# (safe on v5e's 16 MiB default scoped VMEM and v7x's 64 MiB total VMEM) while
# being far past the ~512-lane point where tiled maps reach ~85% of the HBM
# roofline.  Large N therefore still yields a multi-step grid that shards
# across v7x's two TensorCores via dimension_semantics=("parallel",).
_MAX_TILE = 32768


def _round_up(x: int, m: int) -> int:
    return ((x + m - 1) // m) * m


def _balls_kernel(pos_ref, dens_ref):
    # pos_ref: (3, TILE) SoA block of positions; rows = x, y, z,
    #          samples on the lane axis.
    x = pos_ref[0:1, :]  # (1, TILE)
    y = pos_ref[1:2, :]
    z = pos_ref[2:3, :]

    d1 = jnp.square(x - 0.5) + jnp.square(y) + jnp.square(z)
    d2 = jnp.square(x + 0.5) + jnp.square(y + 0.2) + jnp.square(z)
    inside = (d1 < 0.3) | (d2 < 0.8)

    # Single lane-dense (1, TILE) store; radiance is derived in the wrapper.
    dens_ref[...] = jnp.where(inside, 1.0, 0.0).astype(dens_ref.dtype)


def debug_nerf(position, direction=None, mode="balls", max_tile=_MAX_TILE):
    """Pallas implementation of DebugNeRF.forward.

    position:  (N, 3) float32 sample positions (PyTorch convention)
    direction: (N, 3) float32 view directions (unused, kept for parity)
    returns:   (volume_density (N,), radiance (N, 3))
    """
    if mode != "balls":
        return None, None

    position = jnp.asarray(position, jnp.float32)
    n = position.shape[0]

    # SoA layout: samples on the lane axis.  Under jit this transpose fuses
    # into the pallas_call operand (allow_input_fusion) instead of paying an
    # extra HBM round trip.
    pos_t = position.T  # (3, N)

    # Biggest tile (multiple of 128) that covers N, capped at max_tile.
    tile = min(_round_up(n, 128), max_tile)
    grid = (pl.cdiv(n, tile),)

    dens2d = pl.pallas_call(
        _balls_kernel,
        out_shape=jax.ShapeDtypeStruct((1, n), jnp.float32),
        grid=grid,
        in_specs=[pl.BlockSpec((3, tile), lambda i: (0, i))],
        out_specs=pl.BlockSpec((1, tile), lambda i: (0, i)),
        compiler_params=pltpu.CompilerParams(
            dimension_semantics=("parallel",),
            allow_input_fusion=[True],
        ),
    )(pos_t)

    volume_density = dens2d[0]  # (N,)
    # radiance = [density, 0, 0]; rebuilt outside the kernel (trivial XLA op)
    # so the kernel only writes 1N floats instead of 4N.
    radiance = jnp.zeros((n, 3), jnp.float32).at[:, 0].set(volume_density)
    return volume_density, radiance


def _reference(position):
    # Pure-JAX reference mirroring the PyTorch semantics.
    x, y, z = position[:, 0], position[:, 1], position[:, 2]
    b1 = jnp.square(x - 0.5) + jnp.square(y) + jnp.square(z) < 0.3
    b2 = jnp.square(x + 0.5) + jnp.square(y + 0.2) + jnp.square(z) < 0.8
    inside = b1 | b2
    dens = jnp.where(inside, 1.0, 0.0)
    rad = jnp.zeros((position.shape[0], 3), jnp.float32).at[:, 0].set(dens)
    return dens, rad


if __name__ == "__main__":
    key = jax.random.PRNGKey(0)
    k_pos, k_dir = jax.random.split(key)

    fn = jax.jit(debug_nerf)

    # Two small cases: one 128-aligned, one ragged (exercises pl.cdiv tail).
    for n in (384, 300):
        kp = jax.random.fold_in(k_pos, n)
        kd = jax.random.fold_in(k_dir, n)
        position = jax.random.uniform(
            kp, (n, 3), dtype=jnp.float32, minval=-1.0, maxval=1.0
        )
        direction = jax.random.normal(kd, (n, 3), dtype=jnp.float32)

        dens, rad = fn(position, direction)
        dens = jax.block_until_ready(dens)
        rad = jax.block_until_ready(rad)

        ref_dens, ref_rad = _reference(position)
        assert dens.shape == (n,) and rad.shape == (n, 3)
        assert jnp.allclose(dens, ref_dens)
        assert jnp.allclose(rad, ref_rad)

    print("KERNEL_OK")
</pallas_src>

<mosaic_0001>
module attributes {stable_mosaic.version = 11 : i64} {
  func.func @_balls_kernel(%arg0: i32, %arg1: memref<3x384xf32, #tpu.memory_space<vmem>>, %arg2: memref<1x384xf32, #tpu.memory_space<vmem>>) attributes {dimension_semantics = [#tpu.dimension_semantics<parallel>], iteration_bounds = array<i64: 1>, scalar_prefetch = 0 : i64, scratch_operands = 0 : i64, tpu.core_type = #tpu.core_type<tc>, window_params = [{transform_indices = @transform_0, window_bounds = array<i64: 3, 384>}, {transform_indices = @transform_1, window_bounds = array<i64: 1, 384>}]} {
    %c0 = arith.constant 0 : index
    %c0_0 = arith.constant 0 : index
    %0 = vector.load %arg1[%c0, %c0_0] : memref<3x384xf32, #tpu.memory_space<vmem>>, vector<1x384xf32>
    %c1 = arith.constant 1 : index
    %c0_1 = arith.constant 0 : index
    %1 = vector.load %arg1[%c1, %c0_1] : memref<3x384xf32, #tpu.memory_space<vmem>>, vector<1x384xf32>
    %c2 = arith.constant 2 : index
    %c0_2 = arith.constant 0 : index
    %2 = vector.load %arg1[%c2, %c0_2] : memref<3x384xf32, #tpu.memory_space<vmem>>, vector<1x384xf32>
    %cst = arith.constant 5.000000e-01 : f32
    %3 = vector.broadcast %cst : f32 to vector<1x384xf32>
    %4 = arith.subf %0, %3 : vector<1x384xf32>
    %5 = arith.mulf %4, %4 : vector<1x384xf32>
    %6 = arith.mulf %1, %1 : vector<1x384xf32>
    %7 = arith.addf %5, %6 : vector<1x384xf32>
    %8 = arith.mulf %2, %2 : vector<1x384xf32>
    %9 = arith.addf %7, %8 : vector<1x384xf32>
    %cst_3 = arith.constant 5.000000e-01 : f32
    %10 = vector.broadcast %cst_3 : f32 to vector<1x384xf32>
    %11 = arith.addf %0, %10 : vector<1x384xf32>
    %12 = arith.mulf %11, %11 : vector<1x384xf32>
    %cst_4 = arith.constant 2.000000e-01 : f32
    %13 = vector.broadcast %cst_4 : f32 to vector<1x384xf32>
    %14 = arith.addf %1, %13 : vector<1x384xf32>
    %15 = arith.mulf %14, %14 : vector<1x384xf32>
    %16 = arith.addf %12, %15 : vector<1x384xf32>
    %17 = arith.mulf %2, %2 : vector<1x384xf32>
    %18 = arith.addf %16, %17 : vector<1x384xf32>
    %cst_5 = arith.constant 3.000000e-01 : f32
    %19 = vector.broadcast %cst_5 : f32 to vector<1x384xf32>
    %20 = arith.cmpf olt, %9, %19 : vector<1x384xf32>
    %cst_6 = arith.constant 8.000000e-01 : f32
    %21 = vector.broadcast %cst_6 : f32 to vector<1x384xf32>
    %22 = arith.cmpf olt, %18, %21 : vector<1x384xf32>
    %23 = arith.ori %20, %22 : vector<1x384xi1>
    %cst_7 = arith.constant 1.000000e+00 : f32
    %cst_8 = arith.constant 0.000000e+00 : f32
    %24 = vector.broadcast %cst_7 : f32 to vector<1x384xf32>
    %25 = vector.broadcast %cst_8 : f32 to vector<1x384xf32>
    %26 = arith.select %23, %24, %25 : vector<1x384xi1>, vector<1x384xf32>
    %c0_9 = arith.constant 0 : index
    %c0_10 = arith.constant 0 : index
    %27 = vector.load %arg2[%c0_9, %c0_10] : memref<1x384xf32, #tpu.memory_space<vmem>>, vector<1x384xf32>
    tpu.vector_store %arg2[%c0_9, %c0_10], %26 {strides = array<i32>} : memref<1x384xf32, #tpu.memory_space<vmem>>, vector<1x384xf32>,
    return
  }
  func.func @transform_0(%arg0: i32) -> (i32, i32) {
    %c0_i32 = arith.constant 0 : i32
    %c0_i32_0 = arith.constant 0 : i32
    return %c0_i32, %arg0 : i32, i32
  }
  func.func @transform_1(%arg0: i32) -> (i32, i32) {
    %c0_i32 = arith.constant 0 : i32
    %c0_i32_0 = arith.constant 0 : i32
    return %c0_i32, %arg0 : i32, i32
  }
}

</mosaic_0001>

<llo_original>
// kernel: debug_nerf.2
$region0: #{debug_nerf.2}
  #allocation0 [shape = 'u32[]', space=smem, size = 0x4, offset = 0x4, fixed_abs, tag = 'smem constant byte address 0x4 - core index']
  #allocation1 [shape = 'u32[144,128]{1,0:T(1,128)}', space=vmem, size = 0x12000, scoped, tag = 'internal scratch']
  %s0 = inlined_call_operand.vmem [shape: f32[384,3], index: 0, kind: input, shape index: {}]
  %s1 = inlined_call_operand.vmem [shape: f32[1,384], index: 1, kind: output, shape index: {}]
  %s2 = sld [smem:[#allocation0]]
  $region14: #{debug_nerf.2} parent=0
    _
  %s4 = ssub.s32 1, %s2
  %s5 = scalar_select 0, %s4, %s2
  $region1: #{debug_nerf.2} parent=0
    #allocation2 [shape = 'u8[6144]{0}', space=vmem, size = 0x1800, dematerialized = true, scoped, tag = 'FusionAdapter Buffer %fusion.1 = f32[3,384]{1,0:T(4,128)} fusion(%param_0.1), kind=kLoop, calls=%fused_computation.1.clone, metadata={op_name="jit(debug_nerf)/transpose" stack_frame_id=8}']
    // Predicated region
    $region2: #{debug_nerf.2} parent=1 // pred_check
      _
    $region3: #{debug_nerf.2} parent=1 // pred_check_branch
      %7 = sbr.rel (0) target = $region5
    $region4: #{debug_nerf.2} parent=1 // pred_region
      _
    $region5: #{debug_nerf.2} parent=1 // pred_fallthru
      _
    %v8 = vld [vmem:[%s0] sm:$0x7]
    %10 = vst [vmem:[#allocation2] sm:$0xf] %v8
    %s11 = scalar_lea.vmem %s0, 4
    %v12 = vld [vmem:[%s11] sm:$0x7]
    %s13 = scalar_lea.vmem [#allocation2], 4
    %15 = vst [vmem:[%s13] sm:$0xf] %v12
    %s16 = scalar_lea.vmem %s0, 8
    %v17 = vld [vmem:[%s16] sm:$0x7]
    %s18 = scalar_lea.vmem [#allocation2], 8
    %20 = vst [vmem:[%s18] sm:$0xf] %v17
    %v21 = vld [vmem:[#allocation2] ss:$4 sm:$0x7]
    %s22 = scalar_lea.vmem [#allocation2], 1
    %v23 = vld [vmem:[%s22] ss:$4 sm:$0x7]
    %s24 = scalar_lea.vmem [#allocation2], 2
    %v25 = vld [vmem:[%s24] ss:$4 sm:$0x7]
    %v26 = vsub.f32 %v21, 0.5
    %v27 = vmul.f32 %v26, %v26
    %v28 = vmul.f32 %v23, %v23
    %v29 = vadd.f32 %v27, %v28
    %v30 = vmul.f32 %v25, %v25
    %v31 = vadd.f32 %v29, %v30
    %v32 = vadd.f32 %v21, 0.5
    %v33 = vmul.f32 %v32, %v32
    %v34 = vadd.f32 %v23, 0.2
    %v35 = vmul.f32 %v34, %v34
    %v36 = vadd.f32 %v33, %v35
    %v37 = vadd.f32 %v36, %v30
    %vm38 = vcmp.lt.f32.partialorder %v31, 0.3
    %vm39 = vcmp.lt.f32.partialorder %v37, 0.8
    %vm40 = vmor %vm38, %vm39
    %v41 = vsel %vm40, 1.0, 0.0
    %v42 = vlaneseq
    %vm43 = vcmp.ge.s32.totalorder %v42, 0
    %vm44 = vcmp.lt.s32.totalorder %v42, 384
    %vm45 = vmand %vm43, %vm44
    %46 = vst.msk [vmem:[%s1] sm:$0x7] %vm45, %v41
    // Predicated region
    $region6: #{debug_nerf.2} parent=1 // pred_check
      _
    $region7: #{debug_nerf.2} parent=1 // pred_check_branch
      %48 = sbr.rel (0) target = $region9
    $region8: #{debug_nerf.2} parent=1 // pred_region
      _
    $region9: #{debug_nerf.2} parent=1 // pred_fallthru
      _
    // Predicated region
    $region10: #{debug_nerf.2} parent=1 // pred_check
      _
    $region11: #{debug_nerf.2} parent=1 // pred_check_branch
      %50 = sbr.rel (0) target = $region13
    $region12: #{debug_nerf.2} parent=1 // pred_region
      _
    $region13: #{debug_nerf.2} parent=1 // pred_fallthru
      _

</llo_original>
